<compile_context>
chip_gen: v7x
topology: tpu7x:2x2x1
jax: 0.10.0
libtpu: 0.0.40
codegen_flags: <defaults>
</compile_context>

<pallas_src>
import functools
import math

import jax
import jax.numpy as jnp
from jax.experimental import pallas as pl
from jax.experimental.pallas import tpu as pltpu


def _sinusoidal_kernel(x_ref, out_ref, *, scales, use_identity, chunk):
    """One grid step.

    x_ref:   (x_dim, TILE)        channel-first input block (points on lanes)
    out_ref: (TILE, latent_dim)   channel-last output block (final layout)

    Per 512-lane chunk: build the channel-first slab
        [identity | sin(2^d * x) degree-major | sin(2^d * x + pi/2) degree-major]
    lane-dense, pad its row count to a multiple of 8, transpose (XLU work, hidden
    under the HBM-bound DMA), and store the chunk's rows of the output block.
    """
    x_dim = x_ref.shape[0]
    tile = out_ref.shape[0]
    latent_dim = out_ref.shape[1]
    pad = (-latent_dim) % 8                      # sublane-align the transpose source
    n_chunks = tile // chunk

    # Hoisted out of the unrolled loop (broadcast_in_dim is not CSE'd by JAX).
    zpad = jnp.zeros((pad, chunk), jnp.float32) if pad else None

    for c in range(n_chunks):                    # static unroll; all-static indexing
        lo = c * chunk
        xf = x_ref[:, lo:lo + chunk].astype(jnp.float32)          # (x_dim, chunk)
        # Degree-major / channel-minor rows; matches
        # torch.reshape(x[..., None, :] * scales[:, None], [..., num_degs*x_dim]).
        xb = jnp.concatenate([xf * s for s in scales], axis=0)    # (ndx, chunk)
        pieces = []
        if use_identity:
            pieces.append(xf)
        # Two wide lane-dense transcendentals; sin(t + pi/2) == cos(t), exactly the
        # phase-shift formulation of the torch module.
        pieces.append(jnp.sin(xb))
        pieces.append(jnp.sin(xb + 0.5 * math.pi))
        if pad:
            pieces.append(zpad)
        slab = jnp.concatenate(pieces, axis=0)                    # (latent+pad, chunk)
        # (8,128)-aligned in-kernel transpose -> final channel-last layout, then a
        # single store pass into this chunk's rows of the output block.
        out_ref[lo:lo + chunk, :] = slab.T[:, :latent_dim].astype(out_ref.dtype)


def _pick_tile(n, tile_n):
    """Lane tile: multiple of 128, <= tile_n, capped at ~ceil(n/2) so the single
    'parallel' grid axis keeps >= 2 blocks (v7x megacore) whenever n is big
    enough; rounded to a multiple of 512 when possible so the in-kernel chunk
    loop stays short and uniform."""
    cap = -(-n // 2)                  # ceil(n / 2)
    cap = -(-cap // 128) * 128        # round up to a lane multiple
    t = max(128, min(tile_n, cap))
    if t >= 512:
        t = (t // 512) * 512
    return t


def sinusoidal_encode(x, min_deg, max_deg, use_identity=True, tile_n=8192):
    """Pallas TPU implementation of SinusoidalEncoder.forward.

    Args:
      x: [..., x_dim] float array.
    Returns:
      [..., latent_dim], latent_dim = (use_identity + 2*(max_deg-min_deg)) * x_dim
    """
    if max_deg == min_deg:
        # Matches the PyTorch module's degenerate case: return x unchanged
        # (regardless of use_identity).
        return x
    assert tile_n >= 128 and tile_n % 128 == 0, "tile_n must be a multiple of 128"

    x_dim = x.shape[-1]
    num_degs = max_deg - min_deg
    scales = tuple(float(2.0 ** i) for i in range(min_deg, max_deg))
    latent_dim = (int(use_identity) + 2 * num_degs) * x_dim

    orig_lead = x.shape[:-1]
    n = math.prod(orig_lead)
    if n == 0:
        return jnp.zeros((*orig_lead, latent_dim), dtype=x.dtype)

    # Channel-first input for lane-dense compute (small, consciously-accepted
    # layout op: ~20% extra HBM traffic; see header comment / review item 5).
    x_cf = x.reshape(n, x_dim).T                                  # (x_dim, n)

    tile = _pick_tile(n, tile_n)
    if tile % 512 == 0:
        chunk = 512
    elif tile % 256 == 0:
        chunk = 256
    else:
        chunk = 128
    grid = pl.cdiv(n, tile)

    kernel = functools.partial(
        _sinusoidal_kernel, scales=scales, use_identity=use_identity, chunk=chunk
    )
    itemsize = jnp.dtype(x.dtype).itemsize
    cost = pl.CostEstimate(
        flops=3 * num_degs * x_dim * n,
        transcendentals=2 * num_degs * x_dim * n,
        bytes_accessed=(x_dim + latent_dim) * n * itemsize,
    )

    out = pl.pallas_call(
        kernel,
        out_shape=jax.ShapeDtypeStruct((n, latent_dim), x.dtype),
        grid_spec=pltpu.PrefetchScalarGridSpec(
            num_scalar_prefetch=0,
            grid=(grid,),
            in_specs=[pl.BlockSpec((x_dim, tile), lambda i: (0, i))],
            out_specs=pl.BlockSpec((tile, latent_dim), lambda i: (i, 0)),
        ),
        compiler_params=pltpu.CompilerParams(
            dimension_semantics=("parallel",)     # shards the lane-tile grid across TCs on v7x
        ),
        cost_estimate=cost,
    )(x_cf)

    # Free (contiguous, row-major) reshape back to the module's [..., latent_dim].
    return out.reshape(*orig_lead, latent_dim)


def sinusoidal_encode_ref(x, min_deg, max_deg, use_identity=True):
    """Pure-JAX reference mirroring the PyTorch forward exactly."""
    if max_deg == min_deg:
        return x
    scales = jnp.asarray([2.0 ** i for i in range(min_deg, max_deg)], dtype=x.dtype)
    xb = (x[..., None, :] * scales[:, None]).reshape(
        *x.shape[:-1], (max_deg - min_deg) * x.shape[-1]
    )
    latent = jnp.sin(jnp.concatenate([xb, xb + 0.5 * math.pi], axis=-1))
    if use_identity:
        latent = jnp.concatenate([x, latent], axis=-1)
    return latent


if __name__ == "__main__":
    # NOTE: SinusoidalEncoder has no learnable parameters — only the fixed buffer
    # scales = [2^min_deg, ..., 2^(max_deg-1)], rebuilt deterministically here.
    x_dim, min_deg, max_deg = 3, 0, 4  # latent_dim = 3 + 2*4*3 = 27
    expected_latent = (1 + 2 * (max_deg - min_deg)) * x_dim

    key = jax.random.PRNGKey(0)
    k1, k2, k3 = jax.random.split(key, 3)

    # Case 1: lane count divides cleanly (N = 2*128 = 256); grid = 2.
    x1 = jax.random.normal(k1, (2, 128, x_dim), dtype=jnp.float32)
    out1 = jax.block_until_ready(sinusoidal_encode(x1, min_deg, max_deg, True))
    assert out1.shape == (2, 128, expected_latent), out1.shape
    ref1 = sinusoidal_encode_ref(x1, min_deg, max_deg, True)
    assert jnp.allclose(out1, ref1, atol=1e-5, rtol=1e-5), "mismatch vs reference (case 1)"

    # Case 2: ragged N (= 3*70 = 210) exercises the cdiv grid + clipped tail
    # block writeback.
    x2 = jax.random.normal(k2, (3, 70, x_dim), dtype=jnp.float32)
    out2 = jax.block_until_ready(sinusoidal_encode(x2, min_deg, max_deg, True))
    assert out2.shape == (3, 70, expected_latent), out2.shape
    ref2 = sinusoidal_encode_ref(x2, min_deg, max_deg, True)
    assert jnp.allclose(out2, ref2, atol=1e-5, rtol=1e-5), "mismatch vs reference (case 2)"

    # Case 3: use_identity=False path (slab rows already a multiple of 8, no pad).
    out3 = jax.block_until_ready(sinusoidal_encode(x2, min_deg, max_deg, False))
    ref3 = sinusoidal_encode_ref(x2, min_deg, max_deg, False)
    assert out3.shape == (3, 70, 2 * (max_deg - min_deg) * x_dim), out3.shape
    assert jnp.allclose(out3, ref3, atol=1e-5, rtol=1e-5), "mismatch vs reference (case 3)"

    # Case 4: N = 4096 -> tile 2048, grid 2, 4 x 512-lane chunks per tile
    # (exercises the multi-chunk in-kernel transpose/store loop).
    x4 = jax.random.normal(k3, (4096, x_dim), dtype=jnp.float32)
    out4 = jax.block_until_ready(sinusoidal_encode(x4, min_deg, max_deg, True))
    assert out4.shape == (4096, expected_latent), out4.shape
    ref4 = sinusoidal_encode_ref(x4, min_deg, max_deg, True)
    assert jnp.allclose(out4, ref4, atol=1e-5, rtol=1e-5), "mismatch vs reference (case 4)"

    # TODO(synk): the optional enable_sin_lut() LUT-based sin path is not implemented;
    # the default torch.sin forward path is what this kernel reproduces.
    print("KERNEL_OK")
</pallas_src>

<mosaic_0001>
module attributes {stable_mosaic.version = 11 : i64} {
  func.func @_sinusoidal_kernel(%arg0: i32, %arg1: memref<3x128xf32, #tpu.memory_space<vmem>>, %arg2: memref<128x27xf32, #tpu.memory_space<vmem>>) attributes {dimension_semantics = [#tpu.dimension_semantics<parallel>], iteration_bounds = array<i64: 2>, scalar_prefetch = 0 : i64, scratch_operands = 0 : i64, tpu.core_type = #tpu.core_type<tc>, window_params = [{transform_indices = @transform_0, window_bounds = array<i64: 3, 128>}, {transform_indices = @transform_1, window_bounds = array<i64: 128, 27>}]} {
    %cst = arith.constant 0.000000e+00 : f32
    %0 = vector.broadcast %cst : f32 to vector<5x128xf32>
    %c0 = arith.constant 0 : index
    %c0_0 = arith.constant 0 : index
    %1 = vector.load %arg1[%c0, %c0_0] : memref<3x128xf32, #tpu.memory_space<vmem>>, vector<3x128xf32>
    %cst_1 = arith.constant 1.000000e+00 : f32
    %2 = vector.broadcast %cst_1 : f32 to vector<3x128xf32>
    %3 = arith.mulf %1, %2 : vector<3x128xf32>
    %cst_2 = arith.constant 2.000000e+00 : f32
    %4 = vector.broadcast %cst_2 : f32 to vector<3x128xf32>
    %5 = arith.mulf %1, %4 : vector<3x128xf32>
    %cst_3 = arith.constant 4.000000e+00 : f32
    %6 = vector.broadcast %cst_3 : f32 to vector<3x128xf32>
    %7 = arith.mulf %1, %6 : vector<3x128xf32>
    %cst_4 = arith.constant 8.000000e+00 : f32
    %8 = vector.broadcast %cst_4 : f32 to vector<3x128xf32>
    %9 = arith.mulf %1, %8 : vector<3x128xf32>
    %10 = tpu.concatenate %3, %5, %7, %9 in 0 : vector<3x128xf32>, vector<3x128xf32>, vector<3x128xf32>, vector<3x128xf32> -> vector<12x128xf32>
    %11 = math.sin %10 : vector<12x128xf32>
    %cst_5 = arith.constant 1.57079637 : f32
    %12 = vector.broadcast %cst_5 : f32 to vector<12x128xf32>
    %13 = arith.addf %10, %12 : vector<12x128xf32>
    %14 = math.sin %13 : vector<12x128xf32>
    %15 = tpu.concatenate %1, %11, %14, %0 in 0 : vector<3x128xf32>, vector<12x128xf32>, vector<12x128xf32>, vector<5x128xf32> -> vector<32x128xf32>
    %16 = tpu.transpose %15, [1, 0] : vector<32x128xf32> -> vector<128x32xf32>
    %17 = vector.extract_strided_slice %16 {offsets = [0, 0], sizes = [128, 27], strides = [1, 1]} : vector<128x32xf32> to vector<128x27xf32>
    %c0_6 = arith.constant 0 : index
    %c0_7 = arith.constant 0 : index
    %18 = vector.load %arg2[%c0_6, %c0_7] : memref<128x27xf32, #tpu.memory_space<vmem>>, vector<128x27xf32>
    tpu.vector_store %arg2[%c0_6, %c0_7], %17 {strides = array<i32>} : memref<128x27xf32, #tpu.memory_space<vmem>>, vector<128x27xf32>,
    return
  }
  func.func @transform_0(%arg0: i32) -> (i32, i32) {
    %c0_i32 = arith.constant 0 : i32
    %c0_i32_0 = arith.constant 0 : i32
    return %c0_i32, %arg0 : i32, i32
  }
  func.func @transform_1(%arg0: i32) -> (i32, i32) {
    %c0_i32 = arith.constant 0 : i32
    %c0_i32_0 = arith.constant 0 : i32
    return %arg0, %c0_i32 : i32, i32
  }
}

</mosaic_0001>

<llo_original>
// kernel: tpu_custom_call.1
$region0: #{tpu_custom_call.1}
  #allocation0 [shape = 'u32[]', space=smem, size = 0x4, offset = 0x4, fixed_abs, tag = 'smem constant byte address 0x4 - core index']
  #allocation1 [shape = 'u32[144,128]{1,0:T(1,128)}', space=vmem, size = 0x12000, scoped, tag = 'internal scratch']
  %s0 = inlined_call_operand.hbm [shape: f32[3,256], index: 0, kind: input, shape index: {}]
  %s1 = inlined_call_operand.vmem [shape: f32[256,27], index: 1, kind: output, shape index: {}]
  %s2 = sld [smem:[#allocation0]]
  $region41: #{tpu_custom_call.1} parent=0
    _
  %s4 = ssub.s32 1, %s2
  %s5 = scalar_select 0, %s4, %s2
  $region1: #{tpu_custom_call.1} parent=0
    #allocation2 [shape = 'u8[4096]{0}', space=vmem, size = 0x1000, scoped, tag = 'input window, operand 0']
    #allocation3 [shape = 's32[2]{0}', space=sflag, size = 0x8, scoped, tag = 'scoped memory for tpu_custom_call.1']
    %6 = vsyncpa [#allocation3], 0
    %s7 = scalar_lea.sflag [#allocation3], 1
    %8 = vsyncpa %s7, 0
    loop: start=0, step=1, limit=4
    $region2: #{tpu_custom_call.1} parent=1 // loop_pre_header
      _
    $region3: #{tpu_custom_call.1} parent=1 // loop_header
      %s10 = sphi 0, %s14
      %p11 = scmp.ge.s32.totalorder %s10, 4
      %s20 = sphi 0, %s22
      %s23 = sphi 0, %s20
      %s24 = sphi 0, %s23
      %s40 = sphi 0, %s24
      %s46 = sphi 0, %s48
      %s49 = sphi 0, %s46
      %s50 = sphi 0, %s49
      %s66 = sphi 0, %s50
    $region4: #{tpu_custom_call.1} parent=1 // loop_header_branch
      %13 = sbr.rel (%p11) target = $region8
    $region5: #{tpu_custom_call.1} parent=1 // loop_body
      %s15 = ssub.s32 %s10, 1
      %s16 = ssub.s32 %s10, 2
      %s17 = sadd.s32 %s10, 1
      %s18 = ssub.s32 %s10, %s17
      %p19 = scmp.eq.s32.totalorder %s18, 0
      %s21 = sadd.s32 %s20, 1
      %s22 = scalar_select %p19, %s20, %s21
      %p25 = pneg %p19
      %p26 = scmp.eq.s32.totalorder %s10, 1
      %p27 = por %p25, %p26
      %p28 = scmp.ne.s32.totalorder %s20, %s23
      %p29 = scmp.eq.s32.totalorder %s10, 0
      %p30 = por %p28, %p29
      %p31 = scmp.ne.s32.totalorder %s20, %s23
      %p32 = scmp.eq.s32.totalorder %s15, 1
      %p33 = por %p31, %p32
      %p34 = scmp.ne.s32.totalorder %s23, %s24
      %p35 = scmp.eq.s32.totalorder %s15, 0
      %p36 = por %p34, %p35
      %p37 = scmp.ne.s32.totalorder %s23, %s24
      %p38 = scmp.eq.s32.totalorder %s16, 1
      %p39 = por %p37, %p38
      %p41 = scmp.ne.s32.totalorder %s24, %s40
      %p42 = scmp.eq.s32.totalorder %s16, 0
      %p43 = por %p41, %p42
      %s44 = ssub.s32 %s10, %s17
      %p45 = scmp.eq.s32.totalorder %s44, 0
      %s47 = sadd.s32 %s46, 1
      %s48 = scalar_select %p45, %s46, %s47
      %p51 = pneg %p45
      %p52 = scmp.eq.s32.totalorder %s10, 1
      %p53 = por %p51, %p52
      %p54 = scmp.ne.s32.totalorder %s46, %s49
      %p55 = scmp.eq.s32.totalorder %s10, 0
      %p56 = por %p54, %p55
      %p57 = scmp.ne.s32.totalorder %s46, %s49
      %p58 = scmp.eq.s32.totalorder %s15, 1
      %p59 = por %p57, %p58
      %p60 = scmp.ne.s32.totalorder %s49, %s50
      %p61 = scmp.eq.s32.totalorder %s15, 0
      %p62 = por %p60, %p61
      %p63 = scmp.ne.s32.totalorder %s49, %s50
      %p64 = scmp.eq.s32.totalorder %s16, 1
      %p65 = por %p63, %p64
      %p67 = scmp.ne.s32.totalorder %s50, %s66
      %p68 = scmp.eq.s32.totalorder %s16, 0
      %p69 = por %p67, %p68
      %p70 = scmp.le.s32.totalorder 1, %s10
      %p71 = scmp.lt.s32.totalorder %s10, 3
      %p72 = pnand %p70, %p71
      %p73 = pneg %p72
      // Predicated region
      $region9: #{tpu_custom_call.1} parent=5 // pred_check
        _
      $region10: #{tpu_custom_call.1} parent=5 // pred_check_branch
        %75 = sbr.rel (%p72) target = $region12
      $region11: #{tpu_custom_call.1} parent=5 // pred_region
        %s76 = ssub.s32 %s10, 1
      $region12: #{tpu_custom_call.1} parent=5 // pred_fallthru
        _
      %p77 = scmp.lt.s32.totalorder %s10, 2
      // Predicated region
      $region13: #{tpu_custom_call.1} parent=5 // pred_check
        %p78 = pneg %p77
      $region14: #{tpu_custom_call.1} parent=5 // pred_check_branch
        %80 = sbr.rel (%p78) target = $region16
      $region15: #{tpu_custom_call.1} parent=5 // pred_region
        // Predicated region
        $region17: #{tpu_custom_call.1} parent=15 // pred_check
          %p81 = pneg %p30
        $region18: #{tpu_custom_call.1} parent=15 // pred_check_branch
          %83 = sbr.rel (%p81) target = $region20
        $region19: #{tpu_custom_call.1} parent=15 // pred_region
          %s84 = sand.u32 %s20, 1
          %s85 = scalar_lea.sflag [#allocation3], %s84
          %s86 = sand.u32 %s20, 1
          %s87 = smul.addr %s86, 4
          %s88 = scalar_lea.vmem [#allocation2], %s87
          %s90 = ssub.s32 64, 64
          %91 = vsyncadd %s85, %s90
          %s92 = smul.addr %s10, 64
          %s93 = scalar_lea.hbm %s0, %s92
          %s95 = sshll.u32 %s88, 4
          %s96 = int_to_ptr.vmem [resolvable:$true] %s95
          %98 = dma.hbm_to_vmem [thread:$0]  %s93, 64, %s96, %s85
        $region20: #{tpu_custom_call.1} parent=15 // pred_fallthru
          _
      $region16: #{tpu_custom_call.1} parent=5 // pred_fallthru
        _
      %p99 = scmp.le.s32.totalorder 1, %s10
      %p100 = scmp.lt.s32.totalorder %s10, 3
      %p101 = pnand %p99, %p100
      %p102 = pneg %p101
      // Predicated region
      $region21: #{tpu_custom_call.1} parent=5 // pred_check
        _
      $region22: #{tpu_custom_call.1} parent=5 // pred_check_branch
        %104 = sbr.rel (%p101) target = $region24
      $region23: #{tpu_custom_call.1} parent=5 // pred_region
        %s105 = ssub.s32 %s10, 1
        %s106 = sand.u32 %s23, 1
        %s107 = scalar_lea.sflag [#allocation3], %s106
        %s108 = sand.u32 %s23, 1
        %s109 = smul.addr %s108, 4
        %s110 = scalar_lea.vmem [#allocation2], %s109
        // Predicated region
        $region25: #{tpu_custom_call.1} parent=23 // pred_check
          %p111 = pneg %p36
        $region26: #{tpu_custom_call.1} parent=23 // pred_check_branch
          %113 = sbr.rel (%p111) target = $region28
        $region27: #{tpu_custom_call.1} parent=23 // pred_region
          %114 = dma.done %s107, 64
        $region28: #{tpu_custom_call.1} parent=23 // pred_fallthru
          _
        %s115 = sand.u32 %s23, 1
        %s116 = scalar_lea.sflag [#allocation3], %s115
        %s117 = sand.u32 %s23, 1
        %s118 = smul.addr %s117, 4
        %s119 = scalar_lea.vmem [#allocation2], %s118
        %p120 = pneg %p36
        %p121 = pneg %p33
        %p122 = pneg %p62
        %p123 = pneg %p59
        %s124 = smul.u32 16, %s15
        %p125 = scmp.lt.s32.totalorder %s124, 31
        %s126 = scalar_select %p125, %s124, 31
        %s127 = smul.addr %s126, 8
        %s128 = scalar_lea.vmem %s1, %s127
        %s129 = smul.u32 16, %s15
        %p130 = scmp.lt.s32.totalorder %s129, 31
        %s131 = scalar_select %p130, %s129, 31
        %s132 = smul.addr %s131, 8
        %s133 = scalar_lea.vmem %s1, %s132
        %s134 = smul.u32 16, %s15
        %v135 = vld [vmem:[%s110] sm:$0x7]
        %v136 = vmul.f32 %v135, 2.0
        %v137 = vmul.f32 %v135, 4.0
        %v138 = vmul.f32 %v135, 8.0
        %v140 = vrot.slane %v136, 5
        %v143 = vrot.slane %v137, 2
        %v146 = vrot.slane %v138, 7
        %vm148 = vcmask 1042432
        %v149 = vsel %vm148, %v135, %v140
        %vm150 = vcmask 1045504
        %v151 = vsel %vm150, %v149, %v143
        %vm152 = vcmask 1040384
        %v153 = vsel %vm152, %v143, %v146
        %v154 = vand.u32 2147483647, %v151
        %vm155 = vcmp.le.f32.partialorder %v154, 0.7853982
        %vm156 = vcmp.lt.s32.totalorder %v151, 0
        %v157 = vand.u32 %v151, 2139095040
        %v158 = vshrl.u32 %v157, 23
        %v159 = vsub.s32 %v158, 127
        %v160 = vand.u32 2147483647, %v151
        %v161 = vand.u32 %v160, 8388607
        %v162 = vor.u32 %v161, 8388608
        %v163 = vsub.s32 0, %v162
        %v164 = vadd.s32 %v159, 1
        %vm165 = vcmp.gt.s32.totalorder %v164, 0
        %v166 = vsel %vm165, %v164, 0
        %v167 = vshrl.u32 %v166, 5
        %v168 = vand.u32 %v166, 31
        %v169 = vsub.s32 32, %v168
        %v170 = vshrl.u32 683565275, %v169
        %v171 = vshll.u32 683565275, %v168
        %v172 = vshrl.u32 2475754826, %v169
        %v173 = vor.u32 %v171, %v172
        %v174 = vshll.u32 2475754826, %v168
        %v175 = vshrl.u32 2131351028, %v169
        %v176 = vor.u32 %v174, %v175
        %v177 = vshll.u32 2131351028, %v168
        %v178 = vshrl.u32 2102212464, %v169
        %v179 = vor.u32 %v177, %v178
        %v180 = vshll.u32 2102212464, %v168
        %v181 = vshrl.u32 920167782, %v169
        %v182 = vor.u32 %v180, %v181
        %v183 = vshll.u32 920167782, %v168
        %v184 = vshrl.u32 1326507024, %v169
        %v185 = vor.u32 %v183, %v184
        %vm186 = vcmp.lt.s32.totalorder %v167, 1
        %vm187 = vcmp.lt.s32.totalorder %v167, 2
        %vm188 = vcmp.lt.s32.totalorder %v167, 3
        %vm189 = vcmp.lt.s32.totalorder %v167, 4
        %v190 = vsel %vm186, %v170, %v173
        %v191 = vsel %vm189, %v179, 2102212464
        %v192 = vsel %vm188, %v176, %v191
        %v193 = vsel %vm187, %v190, %v192
        %v194 = vsel %vm186, %v173, %v176
        %v195 = vsel %vm189, %v182, 920167782
        %v196 = vsel %vm188, %v179, %v195
        %v197 = vsel %vm187, %v194, %v196
        %v198 = vsel %vm186, %v176, %v179
        %v199 = vsel %vm189, %v185, 1326507024
        %v200 = vsel %vm188, %v182, %v199
        %v201 = vsel %vm187, %v198, %v200
        %v202 = vshll.u32 %v162, 8
        %v203 = vmul.u32.u64.compose %v202, %v201
        %v204 = vextract.low.u32 %v203
        %v205 = vextract.high.u32 %v203
        %v206 = vmul.u32.u64.compose %v202, %v197
        %v207 = vextract.low.u32 %v206
        %v208 = vextract.high.u32 %v206
        %v209 = vmul.u32 %v202, %v193
        %v210 = vadd.s32 %v205, %v207
        %vm211 = vc.u32 %v205, %v207
        %v212 = vadd.s32 %v208, 1
        %v213 = vsel %vm211, %v212, %v208
        %v214 = vadd.s32 %v209, %v213
        %v215 = vadd.s32 %v214, 536870912
        %v216 = vshrl.u32 %v215, 30
        %v217 = vshll.u32 %v216, 30
        %v218 = vsub.s32 %v214, %v217
        %vm219 = vcmp.lt.s32.totalorder %v218, 0
        %v220 = vsub.s32 0, %v218
        %v221 = vsel %vm219, %v220, %v218
        %v222 = vclz %v221
        %v223 = vsub.s32 %v222, 2
        %vm224 = vcmp.gt.s32.totalorder 0, %v223
        %v225 = vsel %vm224, 0, %v223
        %v226 = vsub.s32 32, %v225
        %v227 = vshll.u32 %v218, %v225
        %v228 = vshrl.u32 %v210, %v226
        %v229 = vor.u32 %v227, %v228
        %v230 = vsub.s32 4294967266, %v225
        %v231 = vadd.s32 %v230, 127
        %v232 = vshll.u32 %v231, 23
        %v233 = vor.u32 4788187, %v232
        %v234 = vand.u32 2147483647, %v233
        %v236 = vcvt.s32.f32 %v229
        %v237 = vmul.f32 %v236, %v234
        %v238 = vxor.u32 %v237, 2147483648
        %v239 = vsel %vm156, %v238, %v237
        %v240 = vsub.s32 4, %v216
        %v241 = vsel %vm156, %v240, %v216
        %v242 = vsel %vm155, %v151, %v239
        %v243 = vsel %vm155, 0, %v241
        %v244 = vcosq.f32.pop %v242
        %v245 = vsinq.f32.pop %v242
        %vm246 = vweird.f32 %v151
        %v247 = vadd.s32 %v243, 3
        %v248 = vand.u32 %v247, 3
        %vm249 = vcmp.lt.s32.totalorder %v248, 2
        %vm250 = vcmp.eq.s32.totalorder %v248, 0
        %v251 = vxor.u32 %v245, 2147483648
        %v252 = vsel %vm250, %v244, %v251
        %vm253 = vcmp.eq.s32.totalorder %v248, 2
        %v254 = vxor.u32 %v244, 2147483648
        %v255 = vsel %vm253, %v254, %v245
        %v256 = vsel %vm249, %v252, %v255
        %v257 = vsel %vm246, nan, %v256
        %v258 = vand.u32 2147483647, %v153
        %vm259 = vcmp.le.f32.partialorder %v258, 0.7853982
        %vm260 = vcmp.lt.s32.totalorder %v153, 0
        %v261 = vand.u32 %v153, 2139095040
        %v262 = vshrl.u32 %v261, 23
        %v263 = vsub.s32 %v262, 127
        %v264 = vand.u32 2147483647, %v153
        %v265 = vand.u32 %v264, 8388607
        %v266 = vor.u32 %v265, 8388608
        %v267 = vsub.s32 0, %v266
        %v268 = vadd.s32 %v263, 1
        %vm269 = vcmp.gt.s32.totalorder %v268, 0
        %v270 = vsel %vm269, %v268, 0
        %v271 = vshrl.u32 %v270, 5
        %v272 = vand.u32 %v270, 31
        %v273 = vsub.s32 32, %v272
        %v274 = vshrl.u32 683565275, %v273
        %v275 = vshll.u32 683565275, %v272
        %v276 = vshrl.u32 2475754826, %v273
        %v277 = vor.u32 %v275, %v276
        %v278 = vshll.u32 2475754826, %v272
        %v279 = vshrl.u32 2131351028, %v273
        %v280 = vor.u32 %v278, %v279
        %v281 = vshll.u32 2131351028, %v272
        %v282 = vshrl.u32 2102212464, %v273
        %v283 = vor.u32 %v281, %v282
        %v284 = vshll.u32 2102212464, %v272
        %v285 = vshrl.u32 920167782, %v273
        %v286 = vor.u32 %v284, %v285
        %v287 = vshll.u32 920167782, %v272
        %v288 = vshrl.u32 1326507024, %v273
        %v289 = vor.u32 %v287, %v288
        %vm290 = vcmp.lt.s32.totalorder %v271, 1
        %vm291 = vcmp.lt.s32.totalorder %v271, 2
        %vm292 = vcmp.lt.s32.totalorder %v271, 3
        %vm293 = vcmp.lt.s32.totalorder %v271, 4
        %v294 = vsel %vm290, %v274, %v277
        %v295 = vsel %vm293, %v283, 2102212464
        %v296 = vsel %vm292, %v280, %v295
        %v297 = vsel %vm291, %v294, %v296
        %v298 = vsel %vm290, %v277, %v280
        %v299 = vsel %vm293, %v286, 920167782
        %v300 = vsel %vm292, %v283, %v299
        %v301 = vsel %vm291, %v298, %v300
        %v302 = vsel %vm290, %v280, %v283
        %v303 = vsel %vm293, %v289, 1326507024
        %v304 = vsel %vm292, %v286, %v303
        %v305 = vsel %vm291, %v302, %v304
        %v306 = vshll.u32 %v266, 8
        %v307 = vmul.u32.u64.compose %v306, %v305
        %v308 = vextract.low.u32 %v307
        %v309 = vextract.high.u32 %v307
        %v310 = vmul.u32.u64.compose %v306, %v301
        %v311 = vextract.low.u32 %v310
        %v312 = vextract.high.u32 %v310
        %v313 = vmul.u32 %v306, %v297
        %v314 = vadd.s32 %v309, %v311
        %vm315 = vc.u32 %v309, %v311
        %v316 = vadd.s32 %v312, 1
        %v317 = vsel %vm315, %v316, %v312
        %v318 = vadd.s32 %v313, %v317
        %v319 = vadd.s32 %v318, 536870912
        %v320 = vshrl.u32 %v319, 30
        %v321 = vshll.u32 %v320, 30
        %v322 = vsub.s32 %v318, %v321
        %vm323 = vcmp.lt.s32.totalorder %v322, 0
        %v324 = vsub.s32 0, %v322
        %v325 = vsel %vm323, %v324, %v322
        %v326 = vclz %v325
        %v327 = vsub.s32 %v326, 2
        %vm328 = vcmp.gt.s32.totalorder 0, %v327
        %v329 = vsel %vm328, 0, %v327
        %v330 = vsub.s32 32, %v329
        %v331 = vshll.u32 %v322, %v329
        %v332 = vshrl.u32 %v314, %v330
        %v333 = vor.u32 %v331, %v332
        %v334 = vsub.s32 4294967266, %v329
        %v335 = vadd.s32 %v334, 127
        %v336 = vshll.u32 %v335, 23
        %v337 = vor.u32 4788187, %v336
        %v338 = vand.u32 2147483647, %v337
        %v340 = vcvt.s32.f32 %v333
        %v341 = vmul.f32 %v340, %v338
        %v342 = vxor.u32 %v341, 2147483648
        %v343 = vsel %vm260, %v342, %v341
        %v344 = vsub.s32 4, %v320
        %v345 = vsel %vm260, %v344, %v320
        %v346 = vsel %vm259, %v153, %v343
        %v347 = vsel %vm259, 0, %v345
        %v348 = vcosq.f32.pop %v346
        %v349 = vsinq.f32.pop %v346
        %vm350 = vweird.f32 %v153
        %v351 = vadd.s32 %v347, 3
        %v352 = vand.u32 %v351, 3
        %vm353 = vcmp.lt.s32.totalorder %v352, 2
        %vm354 = vcmp.eq.s32.totalorder %v352, 0
        %v355 = vxor.u32 %v349, 2147483648
        %v356 = vsel %vm354, %v348, %v355
        %vm357 = vcmp.eq.s32.totalorder %v352, 2
        %v358 = vxor.u32 %v348, 2147483648
        %v359 = vsel %vm357, %v358, %v349
        %v360 = vsel %vm353, %v356, %v359
        %v361 = vsel %vm350, nan, %v360
        %v362 = vadd.f32 %v151, 1.5707964
        %v363 = vadd.f32 %v153, 1.5707964
        %v364 = vand.u32 2147483647, %v362
        %vm365 = vcmp.le.f32.partialorder %v364, 0.7853982
        %vm366 = vcmp.lt.s32.totalorder %v362, 0
        %v367 = vand.u32 %v362, 2139095040
        %v368 = vshrl.u32 %v367, 23
        %v369 = vsub.s32 %v368, 127
        %v370 = vand.u32 2147483647, %v362
        %v371 = vand.u32 %v370, 8388607
        %v372 = vor.u32 %v371, 8388608
        %v373 = vsub.s32 0, %v372
        %v374 = vadd.s32 %v369, 1
        %vm375 = vcmp.gt.s32.totalorder %v374, 0
        %v376 = vsel %vm375, %v374, 0
        %v377 = vshrl.u32 %v376, 5
        %v378 = vand.u32 %v376, 31
        %v379 = vsub.s32 32, %v378
        %v380 = vshrl.u32 683565275, %v379
        %v381 = vshll.u32 683565275, %v378
        %v382 = vshrl.u32 2475754826, %v379
        %v383 = vor.u32 %v381, %v382
        %v384 = vshll.u32 2475754826, %v378
        %v385 = vshrl.u32 2131351028, %v379
        %v386 = vor.u32 %v384, %v385
        %v387 = vshll.u32 2131351028, %v378
        %v388 = vshrl.u32 2102212464, %v379
        %v389 = vor.u32 %v387, %v388
        %v390 = vshll.u32 2102212464, %v378
        %v391 = vshrl.u32 920167782, %v379
        %v392 = vor.u32 %v390, %v391
        %v393 = vshll.u32 920167782, %v378
        %v394 = vshrl.u32 1326507024, %v379
        %v395 = vor.u32 %v393, %v394
        %vm396 = vcmp.lt.s32.totalorder %v377, 1
        %vm397 = vcmp.lt.s32.totalorder %v377, 2
        %vm398 = vcmp.lt.s32.totalorder %v377, 3
        %vm399 = vcmp.lt.s32.totalorder %v377, 4
        %v400 = vsel %vm396, %v380, %v383
        %v401 = vsel %vm399, %v389, 2102212464
        %v402 = vsel %vm398, %v386, %v401
        %v403 = vsel %vm397, %v400, %v402
        %v404 = vsel %vm396, %v383, %v386
        %v405 = vsel %vm399, %v392, 920167782
        %v406 = vsel %vm398, %v389, %v405
        %v407 = vsel %vm397, %v404, %v406
        %v408 = vsel %vm396, %v386, %v389
        %v409 = vsel %vm399, %v395, 1326507024
        %v410 = vsel %vm398, %v392, %v409
        %v411 = vsel %vm397, %v408, %v410
        %v412 = vshll.u32 %v372, 8
        %v413 = vmul.u32.u64.compose %v412, %v411
        %v414 = vextract.low.u32 %v413
        %v415 = vextract.high.u32 %v413
        %v416 = vmul.u32.u64.compose %v412, %v407
        %v417 = vextract.low.u32 %v416
        %v418 = vextract.high.u32 %v416
        %v419 = vmul.u32 %v412, %v403
        %v420 = vadd.s32 %v415, %v417
        %vm421 = vc.u32 %v415, %v417
        %v422 = vadd.s32 %v418, 1
        %v423 = vsel %vm421, %v422, %v418
        %v424 = vadd.s32 %v419, %v423
        %v425 = vadd.s32 %v424, 536870912
        %v426 = vshrl.u32 %v425, 30
        %v427 = vshll.u32 %v426, 30
        %v428 = vsub.s32 %v424, %v427
        %vm429 = vcmp.lt.s32.totalorder %v428, 0
        %v430 = vsub.s32 0, %v428
        %v431 = vsel %vm429, %v430, %v428
        %v432 = vclz %v431
        %v433 = vsub.s32 %v432, 2
        %vm434 = vcmp.gt.s32.totalorder 0, %v433
        %v435 = vsel %vm434, 0, %v433
        %v436 = vsub.s32 32, %v435
        %v437 = vshll.u32 %v428, %v435
        %v438 = vshrl.u32 %v420, %v436
        %v439 = vor.u32 %v437, %v438
        %v440 = vsub.s32 4294967266, %v435
        %v441 = vadd.s32 %v440, 127
        %v442 = vshll.u32 %v441, 23
        %v443 = vor.u32 4788187, %v442
        %v444 = vand.u32 2147483647, %v443
        %v446 = vcvt.s32.f32 %v439
        %v447 = vmul.f32 %v446, %v444
        %v448 = vxor.u32 %v447, 2147483648
        %v449 = vsel %vm366, %v448, %v447
        %v450 = vsub.s32 4, %v426
        %v451 = vsel %vm366, %v450, %v426
        %v452 = vsel %vm365, %v362, %v449
        %v453 = vsel %vm365, 0, %v451
        %v454 = vcosq.f32.pop %v452
        %v455 = vsinq.f32.pop %v452
        %vm456 = vweird.f32 %v362
        %v457 = vadd.s32 %v453, 3
        %v458 = vand.u32 %v457, 3
        %vm459 = vcmp.lt.s32.totalorder %v458, 2
        %vm460 = vcmp.eq.s32.totalorder %v458, 0
        %v461 = vxor.u32 %v455, 2147483648
        %v462 = vsel %vm460, %v454, %v461
        %vm463 = vcmp.eq.s32.totalorder %v458, 2
        %v464 = vxor.u32 %v454, 2147483648
        %v465 = vsel %vm463, %v464, %v455
        %v466 = vsel %vm459, %v462, %v465
        %v467 = vsel %vm456, nan, %v466
        %v468 = vand.u32 2147483647, %v363
        %vm469 = vcmp.le.f32.partialorder %v468, 0.7853982
        %vm470 = vcmp.lt.s32.totalorder %v363, 0
        %v471 = vand.u32 %v363, 2139095040
        %v472 = vshrl.u32 %v471, 23
        %v473 = vsub.s32 %v472, 127
        %v474 = vand.u32 2147483647, %v363
        %v475 = vand.u32 %v474, 8388607
        %v476 = vor.u32 %v475, 8388608
        %v477 = vsub.s32 0, %v476
        %v478 = vadd.s32 %v473, 1
        %vm479 = vcmp.gt.s32.totalorder %v478, 0
        %v480 = vsel %vm479, %v478, 0
        %v481 = vshrl.u32 %v480, 5
        %v482 = vand.u32 %v480, 31
        %v483 = vsub.s32 32, %v482
        %v484 = vshrl.u32 683565275, %v483
        %v485 = vshll.u32 683565275, %v482
        %v486 = vshrl.u32 2475754826, %v483
        %v487 = vor.u32 %v485, %v486
        %v488 = vshll.u32 2475754826, %v482
        %v489 = vshrl.u32 2131351028, %v483
        %v490 = vor.u32 %v488, %v489
        %v491 = vshll.u32 2131351028, %v482
        %v492 = vshrl.u32 2102212464, %v483
        %v493 = vor.u32 %v491, %v492
        %v494 = vshll.u32 2102212464, %v482
        %v495 = vshrl.u32 920167782, %v483
        %v496 = vor.u32 %v494, %v495
        %v497 = vshll.u32 920167782, %v482
        %v498 = vshrl.u32 1326507024, %v483
        %v499 = vor.u32 %v497, %v498
        %vm500 = vcmp.lt.s32.totalorder %v481, 1
        %vm501 = vcmp.lt.s32.totalorder %v481, 2
        %vm502 = vcmp.lt.s32.totalorder %v481, 3
        %vm503 = vcmp.lt.s32.totalorder %v481, 4
        %v504 = vsel %vm500, %v484, %v487
        %v505 = vsel %vm503, %v493, 2102212464
        %v506 = vsel %vm502, %v490, %v505
        %v507 = vsel %vm501, %v504, %v506
        %v508 = vsel %vm500, %v487, %v490
        %v509 = vsel %vm503, %v496, 920167782
        %v510 = vsel %vm502, %v493, %v509
        %v511 = vsel %vm501, %v508, %v510
        %v512 = vsel %vm500, %v490, %v493
        %v513 = vsel %vm503, %v499, 1326507024
        %v514 = vsel %vm502, %v496, %v513
        %v515 = vsel %vm501, %v512, %v514
        %v516 = vshll.u32 %v476, 8
        %v517 = vmul.u32.u64.compose %v516, %v515
        %v518 = vextract.low.u32 %v517
        %v519 = vextract.high.u32 %v517
        %v520 = vmul.u32.u64.compose %v516, %v511
        %v521 = vextract.low.u32 %v520
        %v522 = vextract.high.u32 %v520
        %v523 = vmul.u32 %v516, %v507
        %v524 = vadd.s32 %v519, %v521
        %vm525 = vc.u32 %v519, %v521
        %v526 = vadd.s32 %v522, 1
        %v527 = vsel %vm525, %v526, %v522
        %v528 = vadd.s32 %v523, %v527
        %v529 = vadd.s32 %v528, 536870912
        %v530 = vshrl.u32 %v529, 30
        %v531 = vshll.u32 %v530, 30
        %v532 = vsub.s32 %v528, %v531
        %vm533 = vcmp.lt.s32.totalorder %v532, 0
        %v534 = vsub.s32 0, %v532
        %v535 = vsel %vm533, %v534, %v532
        %v536 = vclz %v535
        %v537 = vsub.s32 %v536, 2
        %vm538 = vcmp.gt.s32.totalorder 0, %v537
        %v539 = vsel %vm538, 0, %v537
        %v540 = vsub.s32 32, %v539
        %v541 = vshll.u32 %v532, %v539
        %v542 = vshrl.u32 %v524, %v540
        %v543 = vor.u32 %v541, %v542
        %v544 = vsub.s32 4294967266, %v539
        %v545 = vadd.s32 %v544, 127
        %v546 = vshll.u32 %v545, 23
        %v547 = vor.u32 4788187, %v546
        %v548 = vand.u32 2147483647, %v547
        %v550 = vcvt.s32.f32 %v543
        %v551 = vmul.f32 %v550, %v548
        %v552 = vxor.u32 %v551, 2147483648
        %v553 = vsel %vm470, %v552, %v551
        %v554 = vsub.s32 4, %v530
        %v555 = vsel %vm470, %v554, %v530
        %v556 = vsel %vm469, %v363, %v553
        %v557 = vsel %vm469, 0, %v555
        %v558 = vcosq.f32.pop %v556
        %v559 = vsinq.f32.pop %v556
        %vm560 = vweird.f32 %v363
        %v561 = vadd.s32 %v557, 3
        %v562 = vand.u32 %v561, 3
        %vm563 = vcmp.lt.s32.totalorder %v562, 2
        %vm564 = vcmp.eq.s32.totalorder %v562, 0
        %v565 = vxor.u32 %v559, 2147483648
        %v566 = vsel %vm564, %v558, %v565
        %vm567 = vcmp.eq.s32.totalorder %v562, 2
        %v568 = vxor.u32 %v558, 2147483648
        %v569 = vsel %vm567, %v568, %v559
        %v570 = vsel %vm563, %v566, %v569
        %v571 = vsel %vm560, nan, %v570
        %v574 = vrot.slane %v257, 5
        %v575 = vrot.slane %v361, 5
        %v576 = vsel %vm148, %v574, %v575
        %vm581 = vcmask 1046528
        %v582 = vrot.slane %v467, 1
        %v583 = vrot.slane %v571, 1
        %v584 = vsel %vm581, %v582, %v583
        %v588 = vsel %vm148, %v135, %v574
        %v589 = vsel %vm581, %v576, %v582
        %v590 = vsel %vm148, %v583, 0.0
        %591 = vxpose.xlu0.b32.start [1/16] %v588, 128
        %592 = vxpose.xlu0.b32.cont [2/16] %v589, 128
        %593 = vxpose.xlu0.b32.cont [3/16] %v584, 128
        %594 = vxpose.xlu0.b32.cont [4/16] %v590, 128
        %595 = vxpose.xlu0.b32.cont [5/16] 0.0, 128
        %596 = vxpose.xlu0.b32.cont [6/16] 0.0, 128
        %597 = vxpose.xlu0.b32.cont [7/16] 0.0, 128
        %598 = vxpose.xlu0.b32.cont [8/16] 0.0, 128
        %599 = vxpose.xlu0.b32.cont [9/16] 0.0, 128
        %600 = vxpose.xlu0.b32.cont [10/16] 0.0, 128
        %601 = vxpose.xlu0.b32.cont [11/16] 0.0, 128
        %602 = vxpose.xlu0.b32.cont [12/16] 0.0, 128
        %603 = vxpose.xlu0.b32.cont [13/16] 0.0, 128
        %604 = vxpose.xlu0.b32.cont [14/16] 0.0, 128
        %605 = vxpose.xlu0.b32.cont [15/16] 0.0, 128
        %606 = vxpose.xlu0.b32.end [16/16] 0.0, 128
        %v607 = vpop.trf.xlu0
        %v608 = vpop.trf.xlu0
        %v609 = vpop.trf.xlu0
        %v610 = vpop.trf.xlu0
        %v611 = vpop.trf.xlu0
        %v612 = vpop.trf.xlu0
        %v613 = vpop.trf.xlu0
        %v614 = vpop.trf.xlu0
        %v615 = vpop.trf.xlu0
        %v616 = vpop.trf.xlu0
        %v617 = vpop.trf.xlu0
        %v618 = vpop.trf.xlu0
        %v619 = vpop.trf.xlu0
        %v620 = vpop.trf.xlu0
        %v621 = vpop.trf.xlu0
        %v622 = vpop.trf.xlu0
        %vm623 = vcmask 220160
        %624 = vst.msk [vmem:[%s133] sm:$0xff] %vm623, %v607
        %625 = vst.msk [vmem:[%s133 + $0x8] sm:$0xff] %vm623, %v608
        %626 = vst.msk [vmem:[%s133 + $0x10] sm:$0xff] %vm623, %v609
        %627 = vst.msk [vmem:[%s133 + $0x18] sm:$0xff] %vm623, %v610
        %628 = vst.msk [vmem:[%s133 + $0x20] sm:$0xff] %vm623, %v611
        %629 = vst.msk [vmem:[%s133 + $0x28] sm:$0xff] %vm623, %v612
        %630 = vst.msk [vmem:[%s133 + $0x30] sm:$0xff] %vm623, %v613
        %631 = vst.msk [vmem:[%s133 + $0x38] sm:$0xff] %vm623, %v614
        %632 = vst.msk [vmem:[%s133 + $0x40] sm:$0xff] %vm623, %v615
        %633 = vst.msk [vmem:[%s133 + $0x48] sm:$0xff] %vm623, %v616
        %634 = vst.msk [vmem:[%s133 + $0x50] sm:$0xff] %vm623, %v617
        %635 = vst.msk [vmem:[%s133 + $0x58] sm:$0xff] %vm623, %v618
        %636 = vst.msk [vmem:[%s133 + $0x60] sm:$0xff] %vm623, %v619
        %637 = vst.msk [vmem:[%s133 + $0x68] sm:$0xff] %vm623, %v620
        %638 = vst.msk [vmem:[%s133 + $0x70] sm:$0xff] %vm623, %v621
        %639 = vst.msk [vmem:[%s133 + $0x78] sm:$0xff] %vm623, %v622
        %s640 = smul.u32 16, %s15
        %p641 = scmp.lt.s32.totalorder %s640, 31
        %s642 = scalar_select %p641, %s640, 31
        %s643 = smul.addr %s642, 8
        %s644 = scalar_lea.vmem %s1, %s643
        // Predicated region
        $region29: #{tpu_custom_call.1} parent=23 // pred_check
          %p645 = pneg %p59
        $region30: #{tpu_custom_call.1} parent=23 // pred_check_branch
          %647 = sbr.rel (%p645) target = $region32
        $region31: #{tpu_custom_call.1} parent=23 // pred_region
          %s648 = smul.u32 16, %s15
        $region32: #{tpu_custom_call.1} parent=23 // pred_fallthru
          _
      $region24: #{tpu_custom_call.1} parent=5 // pred_fallthru
        _
      %p649 = scmp.le.s32.totalorder 2, %s10
      // Predicated region
      $region33: #{tpu_custom_call.1} parent=5 // pred_check
        %p650 = pneg %p649
      $region34: #{tpu_custom_call.1} parent=5 // pred_check_branch
        %652 = sbr.rel (%p650) target = $region36
      $region35: #{tpu_custom_call.1} parent=5 // pred_region
        %s653 = ssub.s32 %s10, 2
        // Predicated region
        $region37: #{tpu_custom_call.1} parent=35 // pred_check
          %p654 = pneg %p65
        $region38: #{tpu_custom_call.1} parent=35 // pred_check_branch
          %656 = sbr.rel (%p654) target = $region40
        $region39: #{tpu_custom_call.1} parent=35 // pred_region
          %s657 = smul.u32 16, %s16
          %p658 = scmp.lt.s32.totalorder %s657, 31
          %s659 = scalar_select %p658, %s657, 31
          %s660 = smul.addr %s659, 8
          %s661 = scalar_lea.vmem %s1, %s660
        $region40: #{tpu_custom_call.1} parent=35 // pred_fallthru
          _
      $region36: #{tpu_custom_call.1} parent=5 // pred_fallthru
        _
    $region6: #{tpu_custom_call.1} parent=1 // loop_footer
      %s14 = sadd.s32 1, %s10
    $region7: #{tpu_custom_call.1} parent=1 // loop_footer_branch
      %9 = sbr.rel target = $region3
    $region8: #{tpu_custom_call.1} parent=1 // loop_exit
      _
    %662 = vsyncpa [#allocation3], 1
    %s663 = scalar_lea.sflag [#allocation3], 1
    %664 = vsyncpa %s663, 1

</llo_original>
